<compile_context>
chip_gen: v5e
topology: v5e:2x2
jax: 0.10.0
libtpu: 0.0.40
codegen_flags: <defaults>
</compile_context>

<pallas_src>
import jax
import jax.numpy as jnp
from jax.experimental import pallas as pl
from jax.experimental.pallas import tpu as pltpu


def _make_ce_kernel(eps: float, num_classes: int, batch: int):
    # Fold the 1/B normalization into compile-time constants.
    c_tgt = (1.0 - eps) / float(batch)                    # weight on logp[target]
    c_sm = eps / (float(num_classes) * float(batch))      # weight on sum_c logp[c]

    def ce_kernel(x_ref, t_ref, o_ref):
        xb = x_ref[...]                                   # (TB, K) native dtype
        rows, k = xb.shape

        # Row max in the native dtype (exact for max); upcast once for z.
        m = jnp.max(xb, axis=-1, keepdims=True)                           # (TB, 1)
        z = xb.astype(jnp.float32) - m.astype(jnp.float32)                # (TB, K)

        # Numerically stable logsumexp (per row).
        lse = jnp.log(jnp.sum(jnp.exp(z), axis=-1, keepdims=True))        # (TB, 1)

        # logp[target]: (1, K) iota broadcast-compared against (TB, 1) labels;
        # select z directly instead of materializing an f32 one-hot.
        class_ids = jax.lax.broadcasted_iota(jnp.int32, (1, k), 1)        # (1, K)
        tgt_z = jnp.sum(jnp.where(class_ids == t_ref[...], z, 0.0),
                        axis=-1, keepdims=True)                           # (TB, 1)

        per_row = c_tgt * (tgt_z - lse)
        if eps > 0.0:
            # sum_c logp[c] = sum(z) - K * lse   (no smoothed-target tensor)
            sum_z = jnp.sum(z, axis=-1, keepdims=True)                    # (TB, 1)
            per_row = per_row + c_sm * (sum_z - jnp.float32(k) * lse)

        o_ref[...] = -per_row

    return ce_kernel


def _pick_tile_and_vmem(k: int, itemsize: int, block_rows):
    """Generation-aware batch-tile size + scoped-VMEM limit."""
    vmem_cap = None
    try:
        vmem_cap = int(pltpu.get_tpu_info().vmem_capacity_bytes)
    except Exception:
        vmem_cap = None

    if vmem_cap is not None and vmem_cap >= (100 << 20):
        # v5e / v6e: 128 MiB physical VMEM -> bigger tiles cut per-step overhead.
        tile_budget = 8 << 20
        vmem_limit = 96 << 20
    else:
        # v7x (64 MiB VMEM per TC) or unknown: stay conservative so the f32
        # intermediates (z, exp(z)) plus double-buffered input still fit.
        tile_budget = 4 << 20
        vmem_limit = 40 << 20

    if block_rows is not None:
        return int(block_rows), vmem_limit

    tb = max(1, tile_budget // max(1, k * itemsize))
    tb = max(8, (tb // 8) * 8)
    tb = min(tb, 2048)
    return tb, vmem_limit


def cross_entropy_loss(inputs, targets, *, num_classes, eps=0.1,
                       label_smooth=True, block_rows=None):
    """inputs: (B, K) logits (any float dtype); targets: (B,) int labels.

    Returns the scalar f32 loss: (-smoothed_targets * log_softmax(x)).mean(0).sum()
    """
    eps_eff = float(eps) if label_smooth else 0.0
    b, k = inputs.shape
    assert k == num_classes, (k, num_classes)

    itemsize = jnp.dtype(inputs.dtype).itemsize
    tb, vmem_limit = _pick_tile_and_vmem(k, itemsize, block_rows)

    if b <= tb:
        tb = b                      # single block; full-array dims are always legal
        b_pad = b
    else:
        b_pad = ((b + tb - 1) // tb) * tb

    x = inputs                      # native dtype -> half the HBM bytes for bf16
    t2d = targets.astype(jnp.int32).reshape(b, 1)
    if b_pad != b:
        x = jnp.pad(x, ((0, b_pad - b), (0, 0)))
        t2d = jnp.pad(t2d, ((0, b_pad - b), (0, 0)))

    grid = (b_pad // tb,)

    cost = pl.CostEstimate(
        flops=6 * b_pad * k,
        transcendentals=b_pad * k,
        bytes_accessed=b_pad * k * itemsize + b_pad * 4 + b_pad * 4,
    )

    per_row = pl.pallas_call(
        _make_ce_kernel(eps_eff, num_classes, b),
        out_shape=jax.ShapeDtypeStruct((b_pad, 1), jnp.float32),
        grid=grid,
        in_specs=[
            pl.BlockSpec((tb, k), lambda i: (i, 0)),    # logits tile (native dtype)
            pl.BlockSpec((tb, 1), lambda i: (i, 0)),    # labels tile
        ],
        out_specs=pl.BlockSpec((tb, 1), lambda i: (i, 0)),   # per-row partial losses
        compiler_params=pltpu.CompilerParams(
            dimension_semantics=("parallel",),          # disjoint outputs -> megacore
            vmem_limit_bytes=vmem_limit,
        ),
        cost_estimate=cost,
    )(x, t2d)

    # Padded rows hold finite garbage; drop them before the tiny final reduce.
    return jnp.sum(per_row[:b, 0])


def _reference(logits, labels, num_classes, eps):
    logp = jax.nn.log_softmax(logits.astype(jnp.float32), axis=1)
    onehot = jax.nn.one_hot(labels, num_classes, dtype=jnp.float32)
    smoothed = (1.0 - eps) * onehot + eps / num_classes
    return jnp.sum(jnp.mean(-smoothed * logp, axis=0))


if __name__ == "__main__":
    key = jax.random.PRNGKey(0)

    # --- case 1: f32 logits, batch a multiple of the tile (exercises the grid) ---
    batch, num_classes = 32, 256
    k_logits, k_labels, key = jax.random.split(key, 3)
    logits = jax.random.normal(k_logits, (batch, num_classes), dtype=jnp.float32)
    labels = jax.random.randint(k_labels, (batch,), 0, num_classes, dtype=jnp.int32)

    loss = cross_entropy_loss(logits, labels, num_classes=num_classes,
                              eps=0.1, label_smooth=True, block_rows=8)
    loss = jax.block_until_ready(loss)
    ref = _reference(logits, labels, num_classes, 0.1)
    assert jnp.allclose(loss, ref, rtol=1e-5, atol=1e-5), (loss, ref)

    # --- case 2: bf16 logits (native-dtype DMA) + ragged batch (padding path) ---
    batch2 = 20
    k_logits2, k_labels2, key = jax.random.split(key, 3)
    logits2 = jax.random.normal(k_logits2, (batch2, num_classes),
                                dtype=jnp.float32).astype(jnp.bfloat16)
    labels2 = jax.random.randint(k_labels2, (batch2,), 0, num_classes,
                                 dtype=jnp.int32)

    loss2 = cross_entropy_loss(logits2, labels2, num_classes=num_classes,
                               eps=0.1, label_smooth=True, block_rows=8)
    loss2 = jax.block_until_ready(loss2)
    ref2 = _reference(logits2, labels2, num_classes, 0.1)
    assert jnp.allclose(loss2, ref2, rtol=1e-4, atol=1e-4), (loss2, ref2)

    # --- case 3: label_smooth=False reduces to plain cross entropy (eps==0 path) ---
    loss3 = cross_entropy_loss(logits, labels, num_classes=num_classes,
                               eps=0.1, label_smooth=False, block_rows=8)
    loss3 = jax.block_until_ready(loss3)
    ref3 = _reference(logits, labels, num_classes, 0.0)
    assert jnp.allclose(loss3, ref3, rtol=1e-5, atol=1e-5), (loss3, ref3)

    # --- case 4: K not a multiple of 128 (Market-1501-style) + ragged batch ---
    batch4, num_classes4 = 12, 751
    k_logits4, k_labels4, key = jax.random.split(key, 3)
    logits4 = jax.random.normal(k_logits4, (batch4, num_classes4), dtype=jnp.float32)
    labels4 = jax.random.randint(k_labels4, (batch4,), 0, num_classes4,
                                 dtype=jnp.int32)

    loss4 = cross_entropy_loss(logits4, labels4, num_classes=num_classes4,
                               eps=0.1, label_smooth=True, block_rows=8)
    loss4 = jax.block_until_ready(loss4)
    ref4 = _reference(logits4, labels4, num_classes4, 0.1)
    assert jnp.allclose(loss4, ref4, rtol=1e-5, atol=1e-5), (loss4, ref4)

    # --- case 5: auto (generation-aware) tile selection path ---
    loss5 = cross_entropy_loss(logits, labels, num_classes=num_classes,
                               eps=0.1, label_smooth=True)
    loss5 = jax.block_until_ready(loss5)
    assert jnp.allclose(loss5, ref, rtol=1e-5, atol=1e-5), (loss5, ref)

    print("KERNEL_OK")
</pallas_src>

<mosaic_0001>
module attributes {stable_mosaic.version = 11 : i64} {
  func.func @ce_kernel(%arg0: i32, %arg1: memref<8x256xf32, #tpu.memory_space<vmem>>, %arg2: memref<8x1xi32, #tpu.memory_space<vmem>>, %arg3: memref<8x1xf32, #tpu.memory_space<vmem>>) attributes {dimension_semantics = [#tpu.dimension_semantics<parallel>], iteration_bounds = array<i64: 4>, scalar_prefetch = 0 : i64, scratch_operands = 0 : i64, tpu.core_type = #tpu.core_type<tc>, window_params = [{transform_indices = @transform_0, window_bounds = array<i64: 8, 256>}, {transform_indices = @transform_1, window_bounds = array<i64: 8, 1>}, {transform_indices = @transform_2, window_bounds = array<i64: 8, 1>}]} {
    %c0 = arith.constant 0 : index
    %c0_0 = arith.constant 0 : index
    %0 = vector.load %arg1[%c0, %c0_0] : memref<8x256xf32, #tpu.memory_space<vmem>>, vector<8x256xf32>
    %cst = arith.constant dense<0xFF800000> : vector<8xf32>
    %1 = vector.multi_reduction <maximumf>, %0, %cst [1] : vector<8x256xf32> to vector<8xf32>
    %2 = vector.shape_cast %1 : vector<8xf32> to vector<8x1xf32>
    %3 = vector.broadcast %2 : vector<8x1xf32> to vector<8x256xf32>
    %4 = arith.subf %0, %3 : vector<8x256xf32>
    %5 = math.exp %4 : vector<8x256xf32>
    %cst_1 = arith.constant dense<0.000000e+00> : vector<8xf32>
    %6 = vector.multi_reduction <add>, %5, %cst_1 [1] : vector<8x256xf32> to vector<8xf32>
    %7 = vector.shape_cast %6 : vector<8xf32> to vector<8x1xf32>
    %8 = math.log %7 : vector<8x1xf32>
    %9 = tpu.iota {dimensions = array<i32: 1>} : vector<1x256xi32>
    %c0_2 = arith.constant 0 : index
    %c0_3 = arith.constant 0 : index
    %10 = vector.load %arg2[%c0_2, %c0_3] : memref<8x1xi32, #tpu.memory_space<vmem>>, vector<8x1xi32>
    %11 = vector.broadcast %9 : vector<1x256xi32> to vector<8x256xi32>
    %12 = vector.broadcast %10 : vector<8x1xi32> to vector<8x256xi32>
    %13 = arith.cmpi eq, %11, %12 : vector<8x256xi32>
    %cst_4 = arith.constant 0.000000e+00 : f32
    %14 = vector.broadcast %cst_4 : f32 to vector<8x256xf32>
    %15 = arith.select %13, %4, %14 : vector<8x256xi1>, vector<8x256xf32>
    %cst_5 = arith.constant dense<0.000000e+00> : vector<8xf32>
    %16 = vector.multi_reduction <add>, %15, %cst_5 [1] : vector<8x256xf32> to vector<8xf32>
    %17 = vector.shape_cast %16 : vector<8xf32> to vector<8x1xf32>
    %18 = arith.subf %17, %8 : vector<8x1xf32>
    %cst_6 = arith.constant 2.812500e-02 : f32
    %19 = vector.broadcast %cst_6 : f32 to vector<8x1xf32>
    %20 = arith.mulf %19, %18 : vector<8x1xf32>
    %cst_7 = arith.constant dense<0.000000e+00> : vector<8xf32>
    %21 = vector.multi_reduction <add>, %4, %cst_7 [1] : vector<8x256xf32> to vector<8xf32>
    %22 = vector.shape_cast %21 : vector<8xf32> to vector<8x1xf32>
    %cst_8 = arith.constant 2.560000e+02 : f32
    %23 = vector.broadcast %cst_8 : f32 to vector<8x1xf32>
    %24 = arith.mulf %23, %8 : vector<8x1xf32>
    %25 = arith.subf %22, %24 : vector<8x1xf32>
    %cst_9 = arith.constant 1.22070314E-5 : f32
    %26 = vector.broadcast %cst_9 : f32 to vector<8x1xf32>
    %27 = arith.mulf %26, %25 : vector<8x1xf32>
    %28 = arith.addf %20, %27 : vector<8x1xf32>
    %cst_10 = arith.constant 0.000000e+00 : f32
    %29 = vector.broadcast %cst_10 : f32 to vector<8x1xf32>
    %30 = arith.subf %29, %28 : vector<8x1xf32>
    %c0_11 = arith.constant 0 : index
    %c0_12 = arith.constant 0 : index
    %31 = vector.load %arg3[%c0_11, %c0_12] : memref<8x1xf32, #tpu.memory_space<vmem>>, vector<8x1xf32>
    tpu.vector_store %arg3[%c0_11, %c0_12], %30 {strides = array<i32>} : memref<8x1xf32, #tpu.memory_space<vmem>>, vector<8x1xf32>,
    return
  }
  func.func @transform_0(%arg0: i32) -> (i32, i32) {
    %c0_i32 = arith.constant 0 : i32
    %c0_i32_0 = arith.constant 0 : i32
    return %arg0, %c0_i32 : i32, i32
  }
  func.func @transform_1(%arg0: i32) -> (i32, i32) {
    %c0_i32 = arith.constant 0 : i32
    %c0_i32_0 = arith.constant 0 : i32
    return %arg0, %c0_i32 : i32, i32
  }
  func.func @transform_2(%arg0: i32) -> (i32, i32) {
    %c0_i32 = arith.constant 0 : i32
    %c0_i32_0 = arith.constant 0 : i32
    return %arg0, %c0_i32 : i32, i32
  }
}

</mosaic_0001>

<llo_original>
// kernel: tpu_custom_call.1
$region0: #{tpu_custom_call.1}
  #allocation0 [shape = 'u32[]', space=smem, size = 0x4, offset = 0x4, fixed_abs, tag = 'smem constant byte address 0x4 - core index']
  #allocation1 [shape = 'u32[72,128]{1,0:T(1,128)}', space=vmem, size = 0x9000, scoped, tag = 'internal scratch']
  %s0 = inlined_call_operand.hbm [shape: f32[32,256], index: 0, kind: input, shape index: {}]
  %s1 = inlined_call_operand.vmem [shape: s32[32,1], index: 1, kind: input, shape index: {}]
  %s2 = inlined_call_operand.vmem [shape: f32[32,1], index: 2, kind: output, shape index: {}]
  %s3 = sld [smem:[#allocation0]]
  $region45: #{tpu_custom_call.1} parent=0
    _
  %s5 = ssub.s32 1, %s3
  %s6 = scalar_select 0, %s5, %s3
  $region1: #{tpu_custom_call.1} parent=0
    #allocation2 [shape = 'u8[16384]{0}', space=vmem, size = 0x4000, scoped, tag = 'input window, operand 0']
    #allocation3 [shape = 's32[2]{0}', space=sflag, size = 0x8, scoped, tag = 'scoped memory for tpu_custom_call.1']
    %7 = vsyncpa [#allocation3], 0
    %s8 = scalar_lea.sflag [#allocation3], 1
    %9 = vsyncpa %s8, 0
    loop: start=0, step=1, limit=6
    $region2: #{tpu_custom_call.1} parent=1 // loop_pre_header
      _
    $region3: #{tpu_custom_call.1} parent=1 // loop_header
      %s11 = sphi 0, %s15
      %p12 = scmp.ge.s32.totalorder %s11, 6
      %s21 = sphi 0, %s23
      %s24 = sphi 0, %s21
      %s25 = sphi 0, %s24
      %s41 = sphi 0, %s25
      %s47 = sphi 0, %s49
      %s50 = sphi 0, %s47
      %s51 = sphi 0, %s50
      %s67 = sphi 0, %s51
      %s73 = sphi 0, %s75
      %s76 = sphi 0, %s73
      %s77 = sphi 0, %s76
      %s93 = sphi 0, %s77
    $region4: #{tpu_custom_call.1} parent=1 // loop_header_branch
      %14 = sbr.rel (%p12) target = $region8
    $region5: #{tpu_custom_call.1} parent=1 // loop_body
      %s16 = ssub.s32 %s11, 1
      %s17 = ssub.s32 %s11, 2
      %s18 = sadd.s32 %s11, 1
      %s19 = ssub.s32 %s11, %s18
      %p20 = scmp.eq.s32.totalorder %s19, 0
      %s22 = sadd.s32 %s21, 1
      %s23 = scalar_select %p20, %s21, %s22
      %p26 = pneg %p20
      %p27 = scmp.eq.s32.totalorder %s11, 3
      %p28 = por %p26, %p27
      %p29 = scmp.ne.s32.totalorder %s21, %s24
      %p30 = scmp.eq.s32.totalorder %s11, 0
      %p31 = por %p29, %p30
      %p32 = scmp.ne.s32.totalorder %s21, %s24
      %p33 = scmp.eq.s32.totalorder %s16, 3
      %p34 = por %p32, %p33
      %p35 = scmp.ne.s32.totalorder %s24, %s25
      %p36 = scmp.eq.s32.totalorder %s16, 0
      %p37 = por %p35, %p36
      %p38 = scmp.ne.s32.totalorder %s24, %s25
      %p39 = scmp.eq.s32.totalorder %s17, 3
      %p40 = por %p38, %p39
      %p42 = scmp.ne.s32.totalorder %s25, %s41
      %p43 = scmp.eq.s32.totalorder %s17, 0
      %p44 = por %p42, %p43
      %s45 = ssub.s32 %s11, %s18
      %p46 = scmp.eq.s32.totalorder %s45, 0
      %s48 = sadd.s32 %s47, 1
      %s49 = scalar_select %p46, %s47, %s48
      %p52 = pneg %p46
      %p53 = scmp.eq.s32.totalorder %s11, 3
      %p54 = por %p52, %p53
      %p55 = scmp.ne.s32.totalorder %s47, %s50
      %p56 = scmp.eq.s32.totalorder %s11, 0
      %p57 = por %p55, %p56
      %p58 = scmp.ne.s32.totalorder %s47, %s50
      %p59 = scmp.eq.s32.totalorder %s16, 3
      %p60 = por %p58, %p59
      %p61 = scmp.ne.s32.totalorder %s50, %s51
      %p62 = scmp.eq.s32.totalorder %s16, 0
      %p63 = por %p61, %p62
      %p64 = scmp.ne.s32.totalorder %s50, %s51
      %p65 = scmp.eq.s32.totalorder %s17, 3
      %p66 = por %p64, %p65
      %p68 = scmp.ne.s32.totalorder %s51, %s67
      %p69 = scmp.eq.s32.totalorder %s17, 0
      %p70 = por %p68, %p69
      %s71 = ssub.s32 %s11, %s18
      %p72 = scmp.eq.s32.totalorder %s71, 0
      %s74 = sadd.s32 %s73, 1
      %s75 = scalar_select %p72, %s73, %s74
      %p78 = pneg %p72
      %p79 = scmp.eq.s32.totalorder %s11, 3
      %p80 = por %p78, %p79
      %p81 = scmp.ne.s32.totalorder %s73, %s76
      %p82 = scmp.eq.s32.totalorder %s11, 0
      %p83 = por %p81, %p82
      %p84 = scmp.ne.s32.totalorder %s73, %s76
      %p85 = scmp.eq.s32.totalorder %s16, 3
      %p86 = por %p84, %p85
      %p87 = scmp.ne.s32.totalorder %s76, %s77
      %p88 = scmp.eq.s32.totalorder %s16, 0
      %p89 = por %p87, %p88
      %p90 = scmp.ne.s32.totalorder %s76, %s77
      %p91 = scmp.eq.s32.totalorder %s17, 3
      %p92 = por %p90, %p91
      %p94 = scmp.ne.s32.totalorder %s77, %s93
      %p95 = scmp.eq.s32.totalorder %s17, 0
      %p96 = por %p94, %p95
      %p97 = scmp.le.s32.totalorder 1, %s11
      %p98 = scmp.lt.s32.totalorder %s11, 5
      %p99 = pnand %p97, %p98
      %p100 = pneg %p99
      // Predicated region
      $region9: #{tpu_custom_call.1} parent=5 // pred_check
        _
      $region10: #{tpu_custom_call.1} parent=5 // pred_check_branch
        %102 = sbr.rel (%p99) target = $region12
      $region11: #{tpu_custom_call.1} parent=5 // pred_region
        %s103 = ssub.s32 %s11, 1
      $region12: #{tpu_custom_call.1} parent=5 // pred_fallthru
        _
      %p104 = scmp.lt.s32.totalorder %s11, 4
      // Predicated region
      $region13: #{tpu_custom_call.1} parent=5 // pred_check
        %p105 = pneg %p104
      $region14: #{tpu_custom_call.1} parent=5 // pred_check_branch
        %107 = sbr.rel (%p105) target = $region16
      $region15: #{tpu_custom_call.1} parent=5 // pred_region
        // Predicated region
        $region17: #{tpu_custom_call.1} parent=15 // pred_check
          %p108 = pneg %p31
        $region18: #{tpu_custom_call.1} parent=15 // pred_check_branch
          %110 = sbr.rel (%p108) target = $region20
        $region19: #{tpu_custom_call.1} parent=15 // pred_region
          %s111 = sand.u32 %s21, 1
          %s112 = scalar_lea.sflag [#allocation3], %s111
          %s113 = sand.u32 %s21, 1
          %s114 = smul.addr %s113, 16
          %s115 = scalar_lea.vmem [#allocation2], %s114
          %117 = vsyncadd %s112, 0
          %s118 = smul.addr %s11, 2
          %s119 = smul.addr %s118, 8
          %s120 = scalar_lea.hbm %s0, %s119
          %s122 = sshll.u32 %s120, 4
          %s123 = int_to_ptr.hbm [resolvable:$true] %s122
          %s124 = sshll.u32 %s115, 4
          %s125 = int_to_ptr.vmem [resolvable:$true] %s124
          %127 = dma.hbm_to_vmem [thread:$0]  %s123, 256, %s125, %s112
        $region20: #{tpu_custom_call.1} parent=15 // pred_fallthru
          _
        // Predicated region
        $region21: #{tpu_custom_call.1} parent=15 // pred_check
          %p128 = pneg %p57
        $region22: #{tpu_custom_call.1} parent=15 // pred_check_branch
          %130 = sbr.rel (%p128) target = $region24
        $region23: #{tpu_custom_call.1} parent=15 // pred_region
          %p131 = scmp.lt.s32.totalorder %s11, 3
          %s132 = scalar_select %p131, %s11, 3
          %s133 = smul.addr %s132, 8
          %s134 = scalar_lea.vmem %s1, %s133
        $region24: #{tpu_custom_call.1} parent=15 // pred_fallthru
          _
      $region16: #{tpu_custom_call.1} parent=5 // pred_fallthru
        _
      %p135 = scmp.le.s32.totalorder 1, %s11
      %p136 = scmp.lt.s32.totalorder %s11, 5
      %p137 = pnand %p135, %p136
      %p138 = pneg %p137
      // Predicated region
      $region25: #{tpu_custom_call.1} parent=5 // pred_check
        _
      $region26: #{tpu_custom_call.1} parent=5 // pred_check_branch
        %140 = sbr.rel (%p137) target = $region28
      $region27: #{tpu_custom_call.1} parent=5 // pred_region
        %s141 = ssub.s32 %s11, 1
        %s142 = sand.u32 %s24, 1
        %s143 = scalar_lea.sflag [#allocation3], %s142
        %s144 = sand.u32 %s24, 1
        %s145 = smul.addr %s144, 16
        %s146 = scalar_lea.vmem [#allocation2], %s145
        // Predicated region
        $region29: #{tpu_custom_call.1} parent=27 // pred_check
          %p147 = pneg %p37
        $region30: #{tpu_custom_call.1} parent=27 // pred_check_branch
          %149 = sbr.rel (%p147) target = $region32
        $region31: #{tpu_custom_call.1} parent=27 // pred_region
          %151 = dma.done %s143, 256
        $region32: #{tpu_custom_call.1} parent=27 // pred_fallthru
          _
        %s152 = sand.u32 %s24, 1
        %s153 = scalar_lea.sflag [#allocation3], %s152
        %s154 = sand.u32 %s24, 1
        %s155 = smul.addr %s154, 16
        %s156 = scalar_lea.vmem [#allocation2], %s155
        %p157 = pneg %p37
        %p158 = pneg %p34
        %p159 = scmp.lt.s32.totalorder %s16, 3
        %s160 = scalar_select %p159, %s16, 3
        %s161 = smul.addr %s160, 8
        %s162 = scalar_lea.vmem %s1, %s161
        %p163 = pneg %p63
        %p164 = pneg %p60
        %p165 = pneg %p89
        %p166 = pneg %p86
        %p167 = scmp.lt.s32.totalorder %s16, 3
        %s168 = scalar_select %p167, %s16, 3
        %s169 = smul.addr %s168, 8
        %s170 = scalar_lea.vmem %s2, %s169
        %p171 = scmp.lt.s32.totalorder %s16, 3
        %s172 = scalar_select %p171, %s16, 3
        %s173 = smul.addr %s172, 8
        %s174 = scalar_lea.vmem %s1, %s173
        %p175 = scmp.lt.s32.totalorder %s16, 3
        %s176 = scalar_select %p175, %s16, 3
        %s177 = smul.addr %s176, 8
        %s178 = scalar_lea.vmem %s2, %s177
        %v179 = vld [vmem:[%s146] sm:$0xff]
        %v180 = vld [vmem:[%s146 + $0x8] sm:$0xff]
        %v181 = vmax.f32 %v179, %v180
        %182 = vmax.xlane.f32.xlu0 %v181
        %v183 = vpop.xlane.xlu0 %182
        %v184 = vsub.f32 %v179, %v183
        %v185 = vsub.f32 %v180, %v183
        %v186 = vmul.f32 %v184, 1.442695
        %v187 = vpow.pop %v186
        %v188 = vmul.f32 %v185, 1.442695
        %v189 = vpow.pop %v188
        %v190 = vadd.f32 %v187, %v189
        %191 = vadd.xlane.f32.xlu0 %v190
        %v192 = vpop.xlane.xlu0 %191
        %v193 = vlog2.pop %v192
        %v194 = vmul.f32 %v193, 0.6931472
        %v195 = vlaneseq
        %v196 = vand.u32 %v195, 127
        %v197 = vadd.s32 %v196, 128
        %v198 = vld [vmem:[%s174] sm:$0xff]
        %199 = vset.pattern.permute.xlu0 0
        %200 = vperm.xlu0 %199, %v198
        %v201 = vpop.permute.xlu0 %200
        %vm202 = vcmp.eq.s32.totalorder %v196, %v201
        %vm203 = vcmp.eq.s32.totalorder %v197, %v201
        %v204 = vsel %vm202, %v184, 0.0
        %v205 = vsel %vm203, %v185, 0.0
        %v206 = vadd.f32 %v204, %v205
        %207 = vadd.xlane.f32.xlu0 %v206
        %v208 = vpop.xlane.xlu0 %207
        %v209 = vsub.f32 %v208, %v194
        %v210 = vmul.f32 %v209, 0.028125
        %v211 = vadd.f32 %v184, %v185
        %212 = vadd.xlane.f32.xlu0 %v211
        %v213 = vpop.xlane.xlu0 %212
        %v214 = vmul.f32 %v194, 256.0
        %v215 = vsub.f32 %v213, %v214
        %v216 = vmul.f32 %v215, 1.2207031e-05
        %v217 = vadd.f32 %v210, %v216
        %v218 = vsub.f32 0.0, %v217
        %vm219 = vcmask 7168
        %220 = vst.msk [vmem:[%s178] sm:$0xff] %vm219, %v218
        %p221 = scmp.lt.s32.totalorder %s16, 3
        %s222 = scalar_select %p221, %s16, 3
        %s223 = smul.addr %s222, 8
        %s224 = scalar_lea.vmem %s2, %s223
        // Predicated region
        $region33: #{tpu_custom_call.1} parent=27 // pred_check
          %p225 = pneg %p86
        $region34: #{tpu_custom_call.1} parent=27 // pred_check_branch
          %227 = sbr.rel (%p225) target = $region36
        $region35: #{tpu_custom_call.1} parent=27 // pred_region
          _
        $region36: #{tpu_custom_call.1} parent=27 // pred_fallthru
          _
      $region28: #{tpu_custom_call.1} parent=5 // pred_fallthru
        _
      %p228 = scmp.le.s32.totalorder 2, %s11
      // Predicated region
      $region37: #{tpu_custom_call.1} parent=5 // pred_check
        %p229 = pneg %p228
      $region38: #{tpu_custom_call.1} parent=5 // pred_check_branch
        %231 = sbr.rel (%p229) target = $region40
      $region39: #{tpu_custom_call.1} parent=5 // pred_region
        %s232 = ssub.s32 %s11, 2
        // Predicated region
        $region41: #{tpu_custom_call.1} parent=39 // pred_check
          %p233 = pneg %p92
        $region42: #{tpu_custom_call.1} parent=39 // pred_check_branch
          %235 = sbr.rel (%p233) target = $region44
        $region43: #{tpu_custom_call.1} parent=39 // pred_region
          %p236 = scmp.lt.s32.totalorder %s17, 3
          %s237 = scalar_select %p236, %s17, 3
          %s238 = smul.addr %s237, 8
          %s239 = scalar_lea.vmem %s2, %s238
        $region44: #{tpu_custom_call.1} parent=39 // pred_fallthru
          _
      $region40: #{tpu_custom_call.1} parent=5 // pred_fallthru
        _
    $region6: #{tpu_custom_call.1} parent=1 // loop_footer
      %s15 = sadd.s32 1, %s11
    $region7: #{tpu_custom_call.1} parent=1 // loop_footer_branch
      %10 = sbr.rel target = $region3
    $region8: #{tpu_custom_call.1} parent=1 // loop_exit
      _
    %240 = vsyncpa [#allocation3], 1
    %s241 = scalar_lea.sflag [#allocation3], 1
    %242 = vsyncpa %s241, 1

</llo_original>
